<compile_context>
chip_gen: v6e
topology: v6e:2x2x1
jax: 0.10.0
libtpu: 0.0.40
codegen_flags: <defaults>
</compile_context>

<pallas_src>
import jax
import jax.numpy as jnp
from jax.experimental import pallas as pl
from jax.experimental.pallas import tpu as pltpu


# Packed-parameter column layout inside the single [10, 16] buffer:
#   cols 0:2   -> W1  (torch layout [10, 2])
#   col  2     -> b1  ([10])
#   cols 3:13  -> W2  ([10, 10])
#   col  13    -> b2  ([10])
#   col  14    -> W3^T column ([10])   (torch W3 is [1, 10])
#   col  15    -> b3 in row 0

def mlp_kernel(p_ref, xT_ref, o_ref):
    p = p_ref[...]            # [10, 16] packed params (VMEM-resident)
    xT = xT_ref[...]          # [2, TILE] batch-in-lanes input tile

    w1 = p[:, 0:2]            # [10, 2]
    b1 = p[:, 2:3]            # [10, 1]
    w2 = p[:, 3:13]           # [10, 10]
    b2 = p[:, 13:14]          # [10, 1]
    w3 = p[:, 14:15]          # [10, 1]
    b3 = p[0:1, 15:16]        # [1, 1]

    # Layer 1 (in=2): two VPU broadcast FMAs -> [10, TILE]
    h1 = b1 + w1[:, 0:1] * xT[0:1, :] + w1[:, 1:2] * xT[1:2, :]
    h1 = jnp.maximum(h1, 0.0)

    # Layer 2 (10x10): 10 unrolled VPU broadcast FMAs -> [10, TILE]
    h2 = b2 + w2[:, 0:1] * h1[0:1, :]
    for k in range(1, 10):                      # static, fully unrolled
        h2 = h2 + w2[:, k:k + 1] * h1[k:k + 1, :]
    h2 = jnp.maximum(h2, 0.0)

    # Layer 3 (out=1): VPU mul + sublane reduce -> [1, TILE] (lane-dense)
    out = b3 + jnp.sum(w3 * h2, axis=0, keepdims=True)
    o_ref[...] = out.astype(o_ref.dtype)


def pack_params(p):
    """Pack torch-layout params into a single [10, 16] f32 buffer."""
    buf = jnp.zeros((10, 16), jnp.float32)
    buf = buf.at[:, 0:2].set(p["w1"].astype(jnp.float32))     # [10, 2]
    buf = buf.at[:, 2].set(p["b1"].astype(jnp.float32))       # [10]
    buf = buf.at[:, 3:13].set(p["w2"].astype(jnp.float32))    # [10, 10]
    buf = buf.at[:, 13].set(p["b2"].astype(jnp.float32))      # [10]
    buf = buf.at[:, 14].set(p["w3"][0, :].astype(jnp.float32))  # [10]
    buf = buf.at[0, 15].set(p["b3"][0].astype(jnp.float32))
    return buf


def network_forward(x, params, *, tile_n=512):
    """x: [N, 2] float32; params in PyTorch Linear layout. Returns [N, 1]."""
    assert tile_n % 128 == 0, "batch tile must be a multiple of 128 (lane axis)"
    n = x.shape[0]
    n_pad = pl.cdiv(n, tile_n) * tile_n

    # Batch-in-lanes: x^T [2, N], zero-padded to a whole number of tiles.
    xT = jnp.zeros((2, n_pad), jnp.float32).at[:, :n].set(
        x.T.astype(jnp.float32))
    p = pack_params(params)                       # single parameter stream

    grid = (n_pad // tile_n,)
    out_t = pl.pallas_call(
        mlp_kernel,
        out_shape=jax.ShapeDtypeStruct((1, n_pad), jnp.float32),
        grid_spec=pltpu.PrefetchScalarGridSpec(
            num_scalar_prefetch=0,
            grid=grid,
            in_specs=[
                # packed params: constant index_map -> stays VMEM-resident
                pl.BlockSpec((10, 16), lambda i: (0, 0)),
                # x^T batch tile: feature dim full-extent, batch tiled on lanes
                pl.BlockSpec((2, tile_n), lambda i: (0, i)),
            ],
            # lane-dense output tile -> unmasked vector stores
            out_specs=pl.BlockSpec((1, tile_n), lambda i: (0, i)),
        ),
        compiler_params=pltpu.CompilerParams(
            dimension_semantics=("parallel",),    # v7x: shard across both TCs
            vmem_limit_bytes=32 * 1024 * 1024,    # explicit, safe on v5e/v6e/v7x
        ),
    )(p, xT)

    return out_t[:, :n].T                         # back to [N, 1]


def init_params(key):
    """Deterministic init matching torch.nn.Linear default (torch layouts)."""
    ks = jax.random.split(key, 6)

    def u(k, shape, fan_in):
        lim = 1.0 / jnp.sqrt(jnp.float32(fan_in))
        return jax.random.uniform(k, shape, jnp.float32, -lim, lim)

    return {
        "w1": u(ks[0], (10, 2), 2),    "b1": u(ks[1], (10,), 2),
        "w2": u(ks[2], (10, 10), 10),  "b2": u(ks[3], (10,), 10),
        "w3": u(ks[4], (1, 10), 10),   "b3": u(ks[5], (1,), 10),
    }


def reference_forward(x, p):
    hp = jax.lax.Precision.HIGHEST
    h1 = jnp.maximum(jnp.dot(x, p["w1"].T, precision=hp) + p["b1"], 0.0)
    h2 = jnp.maximum(jnp.dot(h1, p["w2"].T, precision=hp) + p["b2"], 0.0)
    return jnp.dot(h2, p["w3"].T, precision=hp) + p["b3"]


# TODO(synk): Network.one_forward / train / test (SGD/Adam updates, backward,
# CrossEntropyLoss) are training/eval utilities and are not ported; only the
# forward pass is implemented as a Pallas kernel.

if __name__ == "__main__":
    key = jax.random.PRNGKey(0)
    kx, kp = jax.random.split(key)

    N = 1000                                  # pads to 1024 -> 2 grid steps of 512
    x = jax.random.normal(kx, (N, 2), jnp.float32)
    params = init_params(kp)

    out = network_forward(x, params, tile_n=512)
    out = jax.block_until_ready(out)

    ref = reference_forward(x, params)
    assert out.shape == (N, 1)
    err = float(jnp.max(jnp.abs(out - ref)))
    assert jnp.allclose(out, ref, atol=1e-5, rtol=1e-5), err

    print("KERNEL_OK")
</pallas_src>

<mosaic_0001>
module attributes {stable_mosaic.version = 11 : i64} {
  func.func @mlp_kernel(%arg0: i32, %arg1: memref<10x16xf32, #tpu.memory_space<vmem>>, %arg2: memref<2x512xf32, #tpu.memory_space<vmem>>, %arg3: memref<1x512xf32, #tpu.memory_space<vmem>>) attributes {dimension_semantics = [#tpu.dimension_semantics<parallel>], iteration_bounds = array<i64: 2>, scalar_prefetch = 0 : i64, scratch_operands = 0 : i64, tpu.core_type = #tpu.core_type<tc>, window_params = [{pipeline_mode = #tpu.pipeline_mode<synchronous>, transform_indices = @transform_0, window_bounds = array<i64: 10, 16>}, {transform_indices = @transform_1, window_bounds = array<i64: 2, 512>}, {transform_indices = @transform_2, window_bounds = array<i64: 1, 512>}]} {
    %c0 = arith.constant 0 : index
    %c0_0 = arith.constant 0 : index
    %0 = vector.load %arg1[%c0, %c0_0] : memref<10x16xf32, #tpu.memory_space<vmem>>, vector<10x16xf32>
    %c0_1 = arith.constant 0 : index
    %c0_2 = arith.constant 0 : index
    %1 = vector.load %arg2[%c0_1, %c0_2] : memref<2x512xf32, #tpu.memory_space<vmem>>, vector<2x512xf32>
    %2 = vector.extract_strided_slice %0 {offsets = [0, 0], sizes = [10, 2], strides = [1, 1]} : vector<10x16xf32> to vector<10x2xf32>
    %3 = vector.extract_strided_slice %0 {offsets = [0, 2], sizes = [10, 1], strides = [1, 1]} : vector<10x16xf32> to vector<10x1xf32>
    %4 = vector.extract_strided_slice %0 {offsets = [0, 3], sizes = [10, 10], strides = [1, 1]} : vector<10x16xf32> to vector<10x10xf32>
    %5 = vector.extract_strided_slice %0 {offsets = [0, 13], sizes = [10, 1], strides = [1, 1]} : vector<10x16xf32> to vector<10x1xf32>
    %6 = vector.extract_strided_slice %0 {offsets = [0, 14], sizes = [10, 1], strides = [1, 1]} : vector<10x16xf32> to vector<10x1xf32>
    %7 = vector.extract_strided_slice %0 {offsets = [0, 15], sizes = [1, 1], strides = [1, 1]} : vector<10x16xf32> to vector<1x1xf32>
    %8 = vector.extract_strided_slice %2 {offsets = [0, 0], sizes = [10, 1], strides = [1, 1]} : vector<10x2xf32> to vector<10x1xf32>
    %9 = vector.extract_strided_slice %1 {offsets = [0, 0], sizes = [1, 512], strides = [1, 1]} : vector<2x512xf32> to vector<1x512xf32>
    %10 = vector.broadcast %8 : vector<10x1xf32> to vector<10x512xf32>
    %11 = vector.broadcast %9 : vector<1x512xf32> to vector<10x512xf32>
    %12 = arith.mulf %10, %11 : vector<10x512xf32>
    %13 = vector.broadcast %3 : vector<10x1xf32> to vector<10x512xf32>
    %14 = arith.addf %13, %12 : vector<10x512xf32>
    %15 = vector.extract_strided_slice %2 {offsets = [0, 1], sizes = [10, 1], strides = [1, 1]} : vector<10x2xf32> to vector<10x1xf32>
    %16 = vector.extract_strided_slice %1 {offsets = [1, 0], sizes = [1, 512], strides = [1, 1]} : vector<2x512xf32> to vector<1x512xf32>
    %17 = vector.broadcast %15 : vector<10x1xf32> to vector<10x512xf32>
    %18 = vector.broadcast %16 : vector<1x512xf32> to vector<10x512xf32>
    %19 = arith.mulf %17, %18 : vector<10x512xf32>
    %20 = arith.addf %14, %19 : vector<10x512xf32>
    %cst = arith.constant 0.000000e+00 : f32
    %21 = vector.broadcast %cst : f32 to vector<10x512xf32>
    %22 = arith.maximumf %20, %21 : vector<10x512xf32>
    %23 = vector.extract_strided_slice %4 {offsets = [0, 0], sizes = [10, 1], strides = [1, 1]} : vector<10x10xf32> to vector<10x1xf32>
    %24 = vector.extract_strided_slice %22 {offsets = [0, 0], sizes = [1, 512], strides = [1, 1]} : vector<10x512xf32> to vector<1x512xf32>
    %25 = vector.broadcast %23 : vector<10x1xf32> to vector<10x512xf32>
    %26 = vector.broadcast %24 : vector<1x512xf32> to vector<10x512xf32>
    %27 = arith.mulf %25, %26 : vector<10x512xf32>
    %28 = vector.broadcast %5 : vector<10x1xf32> to vector<10x512xf32>
    %29 = arith.addf %28, %27 : vector<10x512xf32>
    %30 = vector.extract_strided_slice %4 {offsets = [0, 1], sizes = [10, 1], strides = [1, 1]} : vector<10x10xf32> to vector<10x1xf32>
    %31 = vector.extract_strided_slice %22 {offsets = [1, 0], sizes = [1, 512], strides = [1, 1]} : vector<10x512xf32> to vector<1x512xf32>
    %32 = vector.broadcast %30 : vector<10x1xf32> to vector<10x512xf32>
    %33 = vector.broadcast %31 : vector<1x512xf32> to vector<10x512xf32>
    %34 = arith.mulf %32, %33 : vector<10x512xf32>
    %35 = arith.addf %29, %34 : vector<10x512xf32>
    %36 = vector.extract_strided_slice %4 {offsets = [0, 2], sizes = [10, 1], strides = [1, 1]} : vector<10x10xf32> to vector<10x1xf32>
    %37 = vector.extract_strided_slice %22 {offsets = [2, 0], sizes = [1, 512], strides = [1, 1]} : vector<10x512xf32> to vector<1x512xf32>
    %38 = vector.broadcast %36 : vector<10x1xf32> to vector<10x512xf32>
    %39 = vector.broadcast %37 : vector<1x512xf32> to vector<10x512xf32>
    %40 = arith.mulf %38, %39 : vector<10x512xf32>
    %41 = arith.addf %35, %40 : vector<10x512xf32>
    %42 = vector.extract_strided_slice %4 {offsets = [0, 3], sizes = [10, 1], strides = [1, 1]} : vector<10x10xf32> to vector<10x1xf32>
    %43 = vector.extract_strided_slice %22 {offsets = [3, 0], sizes = [1, 512], strides = [1, 1]} : vector<10x512xf32> to vector<1x512xf32>
    %44 = vector.broadcast %42 : vector<10x1xf32> to vector<10x512xf32>
    %45 = vector.broadcast %43 : vector<1x512xf32> to vector<10x512xf32>
    %46 = arith.mulf %44, %45 : vector<10x512xf32>
    %47 = arith.addf %41, %46 : vector<10x512xf32>
    %48 = vector.extract_strided_slice %4 {offsets = [0, 4], sizes = [10, 1], strides = [1, 1]} : vector<10x10xf32> to vector<10x1xf32>
    %49 = vector.extract_strided_slice %22 {offsets = [4, 0], sizes = [1, 512], strides = [1, 1]} : vector<10x512xf32> to vector<1x512xf32>
    %50 = vector.broadcast %48 : vector<10x1xf32> to vector<10x512xf32>
    %51 = vector.broadcast %49 : vector<1x512xf32> to vector<10x512xf32>
    %52 = arith.mulf %50, %51 : vector<10x512xf32>
    %53 = arith.addf %47, %52 : vector<10x512xf32>
    %54 = vector.extract_strided_slice %4 {offsets = [0, 5], sizes = [10, 1], strides = [1, 1]} : vector<10x10xf32> to vector<10x1xf32>
    %55 = vector.extract_strided_slice %22 {offsets = [5, 0], sizes = [1, 512], strides = [1, 1]} : vector<10x512xf32> to vector<1x512xf32>
    %56 = vector.broadcast %54 : vector<10x1xf32> to vector<10x512xf32>
    %57 = vector.broadcast %55 : vector<1x512xf32> to vector<10x512xf32>
    %58 = arith.mulf %56, %57 : vector<10x512xf32>
    %59 = arith.addf %53, %58 : vector<10x512xf32>
    %60 = vector.extract_strided_slice %4 {offsets = [0, 6], sizes = [10, 1], strides = [1, 1]} : vector<10x10xf32> to vector<10x1xf32>
    %61 = vector.extract_strided_slice %22 {offsets = [6, 0], sizes = [1, 512], strides = [1, 1]} : vector<10x512xf32> to vector<1x512xf32>
    %62 = vector.broadcast %60 : vector<10x1xf32> to vector<10x512xf32>
    %63 = vector.broadcast %61 : vector<1x512xf32> to vector<10x512xf32>
    %64 = arith.mulf %62, %63 : vector<10x512xf32>
    %65 = arith.addf %59, %64 : vector<10x512xf32>
    %66 = vector.extract_strided_slice %4 {offsets = [0, 7], sizes = [10, 1], strides = [1, 1]} : vector<10x10xf32> to vector<10x1xf32>
    %67 = vector.extract_strided_slice %22 {offsets = [7, 0], sizes = [1, 512], strides = [1, 1]} : vector<10x512xf32> to vector<1x512xf32>
    %68 = vector.broadcast %66 : vector<10x1xf32> to vector<10x512xf32>
    %69 = vector.broadcast %67 : vector<1x512xf32> to vector<10x512xf32>
    %70 = arith.mulf %68, %69 : vector<10x512xf32>
    %71 = arith.addf %65, %70 : vector<10x512xf32>
    %72 = vector.extract_strided_slice %4 {offsets = [0, 8], sizes = [10, 1], strides = [1, 1]} : vector<10x10xf32> to vector<10x1xf32>
    %73 = vector.extract_strided_slice %22 {offsets = [8, 0], sizes = [1, 512], strides = [1, 1]} : vector<10x512xf32> to vector<1x512xf32>
    %74 = vector.broadcast %72 : vector<10x1xf32> to vector<10x512xf32>
    %75 = vector.broadcast %73 : vector<1x512xf32> to vector<10x512xf32>
    %76 = arith.mulf %74, %75 : vector<10x512xf32>
    %77 = arith.addf %71, %76 : vector<10x512xf32>
    %78 = vector.extract_strided_slice %4 {offsets = [0, 9], sizes = [10, 1], strides = [1, 1]} : vector<10x10xf32> to vector<10x1xf32>
    %79 = vector.extract_strided_slice %22 {offsets = [9, 0], sizes = [1, 512], strides = [1, 1]} : vector<10x512xf32> to vector<1x512xf32>
    %80 = vector.broadcast %78 : vector<10x1xf32> to vector<10x512xf32>
    %81 = vector.broadcast %79 : vector<1x512xf32> to vector<10x512xf32>
    %82 = arith.mulf %80, %81 : vector<10x512xf32>
    %83 = arith.addf %77, %82 : vector<10x512xf32>
    %cst_3 = arith.constant 0.000000e+00 : f32
    %84 = vector.broadcast %cst_3 : f32 to vector<10x512xf32>
    %85 = arith.maximumf %83, %84 : vector<10x512xf32>
    %86 = vector.broadcast %6 : vector<10x1xf32> to vector<10x512xf32>
    %87 = arith.mulf %86, %85 : vector<10x512xf32>
    %cst_4 = arith.constant dense<0.000000e+00> : vector<512xf32>
    %88 = vector.multi_reduction <add>, %87, %cst_4 [0] : vector<10x512xf32> to vector<512xf32>
    %89 = vector.shape_cast %88 : vector<512xf32> to vector<1x512xf32>
    %90 = vector.broadcast %7 : vector<1x1xf32> to vector<1x512xf32>
    %91 = arith.addf %90, %89 : vector<1x512xf32>
    %c0_5 = arith.constant 0 : index
    %c0_6 = arith.constant 0 : index
    %92 = vector.load %arg3[%c0_5, %c0_6] : memref<1x512xf32, #tpu.memory_space<vmem>>, vector<1x512xf32>
    tpu.vector_store %arg3[%c0_5, %c0_6], %91 {strides = array<i32>} : memref<1x512xf32, #tpu.memory_space<vmem>>, vector<1x512xf32>,
    return
  }
  func.func @transform_0(%arg0: i32) -> (i32, i32) {
    %c0_i32 = arith.constant 0 : i32
    %c0_i32_0 = arith.constant 0 : i32
    %c0_i32_1 = arith.constant 0 : i32
    return %c0_i32, %c0_i32_0 : i32, i32
  }
  func.func @transform_1(%arg0: i32) -> (i32, i32) {
    %c0_i32 = arith.constant 0 : i32
    %c0_i32_0 = arith.constant 0 : i32
    return %c0_i32, %arg0 : i32, i32
  }
  func.func @transform_2(%arg0: i32) -> (i32, i32) {
    %c0_i32 = arith.constant 0 : i32
    %c0_i32_0 = arith.constant 0 : i32
    return %c0_i32, %arg0 : i32, i32
  }
}

</mosaic_0001>

<llo_original>
// kernel: tpu_custom_call.1
$region0: #{tpu_custom_call.1}
  #allocation0 [shape = 'u32[]', space=smem, size = 0x4, offset = 0x4, fixed_abs, tag = 'smem constant byte address 0x4 - core index']
  #allocation1 [shape = 'u32[144,128]{1,0:T(1,128)}', space=vmem, size = 0x12000, scoped, tag = 'internal scratch']
  %s0 = inlined_call_operand.hbm [shape: f32[10,16], index: 0, kind: input, shape index: {}]
  %s1 = inlined_call_operand.hbm [shape: f32[2,1024], index: 1, kind: input, shape index: {}]
  %s2 = inlined_call_operand.hbm [shape: f32[1,1024], index: 2, kind: output, shape index: {}]
  %s3 = sld [smem:[#allocation0]]
  $region49: #{tpu_custom_call.1} parent=0
    _
  %s5 = ssub.s32 1, %s3
  %s6 = scalar_select 0, %s5, %s3
  $region1: #{tpu_custom_call.1} parent=0
    #allocation2 [shape = 'u8[8192]{0}', space=vmem, size = 0x2000, scoped, tag = 'input window, operand 0, single buffered']
    #allocation3 [shape = 's32[2]{0}', space=sflag, size = 0x8, scoped, tag = 'scoped memory for tpu_custom_call.1']
    #allocation4 [shape = 's32[2]{0}', space=sflag, size = 0x8, scoped, tag = 'scoped memory for tpu_custom_call.1']
    #allocation5 [shape = 'u8[8192]{0}', space=vmem, size = 0x2000, scoped, tag = 'input window, operand 1']
    #allocation6 [shape = 's32[2]{0}', space=sflag, size = 0x8, scoped, tag = 'scoped memory for tpu_custom_call.1']
    #allocation7 [shape = 'u8[4096]{0}', space=vmem, size = 0x1000, scoped, tag = 'output window, operand 0']
    %7 = vsyncpa [#allocation3], 0
    %8 = vsyncpa [#allocation6], 0
    %s9 = scalar_lea.sflag [#allocation6], 1
    %10 = vsyncpa %s9, 0
    %11 = vsyncpa [#allocation4], 0
    %s12 = scalar_lea.sflag [#allocation4], 1
    %13 = vsyncpa %s12, 0
    loop: start=0, step=1, limit=4
    $region2: #{tpu_custom_call.1} parent=1 // loop_pre_header
      _
    $region3: #{tpu_custom_call.1} parent=1 // loop_header
      %s15 = sphi 0, %s19
      %p16 = scmp.ge.s32.totalorder %s15, 4
      %s23 = sphi 0, %s23
      %s25 = sphi 0, %s23
      %s26 = sphi 0, %s25
      %s40 = sphi 0, %s26
      %s46 = sphi 0, %s48
      %s49 = sphi 0, %s46
      %s50 = sphi 0, %s49
      %s66 = sphi 0, %s50
      %s72 = sphi 0, %s74
      %s75 = sphi 0, %s72
      %s76 = sphi 0, %s75
      %s92 = sphi 0, %s76
    $region4: #{tpu_custom_call.1} parent=1 // loop_header_branch
      %18 = sbr.rel (%p16) target = $region8
    $region5: #{tpu_custom_call.1} parent=1 // loop_body
      %s20 = ssub.s32 %s15, 1
      %s21 = ssub.s32 %s15, 2
      %s22 = sadd.s32 %s15, 1
      %s24 = sadd.s32 %s23, 1
      %p27 = scmp.eq.s32.totalorder %s15, 1
      %p28 = scmp.ne.s32.totalorder %s23, %s25
      %p29 = scmp.eq.s32.totalorder %s15, 0
      %p30 = por %p28, %p29
      %p31 = scmp.ne.s32.totalorder %s23, %s25
      %p32 = scmp.eq.s32.totalorder %s20, 1
      %p33 = por %p31, %p32
      %p34 = scmp.ne.s32.totalorder %s25, %s26
      %p35 = scmp.eq.s32.totalorder %s20, 0
      %p36 = por %p34, %p35
      %p37 = scmp.ne.s32.totalorder %s25, %s26
      %p38 = scmp.eq.s32.totalorder %s21, 1
      %p39 = por %p37, %p38
      %p41 = scmp.ne.s32.totalorder %s26, %s40
      %p42 = scmp.eq.s32.totalorder %s21, 0
      %p43 = por %p41, %p42
      %s44 = ssub.s32 %s15, %s22
      %p45 = scmp.eq.s32.totalorder %s44, 0
      %s47 = sadd.s32 %s46, 1
      %s48 = scalar_select %p45, %s46, %s47
      %p51 = pneg %p45
      %p52 = scmp.eq.s32.totalorder %s15, 1
      %p53 = por %p51, %p52
      %p54 = scmp.ne.s32.totalorder %s46, %s49
      %p55 = scmp.eq.s32.totalorder %s15, 0
      %p56 = por %p54, %p55
      %p57 = scmp.ne.s32.totalorder %s46, %s49
      %p58 = scmp.eq.s32.totalorder %s20, 1
      %p59 = por %p57, %p58
      %p60 = scmp.ne.s32.totalorder %s49, %s50
      %p61 = scmp.eq.s32.totalorder %s20, 0
      %p62 = por %p60, %p61
      %p63 = scmp.ne.s32.totalorder %s49, %s50
      %p64 = scmp.eq.s32.totalorder %s21, 1
      %p65 = por %p63, %p64
      %p67 = scmp.ne.s32.totalorder %s50, %s66
      %p68 = scmp.eq.s32.totalorder %s21, 0
      %p69 = por %p67, %p68
      %s70 = ssub.s32 %s15, %s22
      %p71 = scmp.eq.s32.totalorder %s70, 0
      %s73 = sadd.s32 %s72, 1
      %s74 = scalar_select %p71, %s72, %s73
      %p77 = pneg %p71
      %p78 = scmp.eq.s32.totalorder %s15, 1
      %p79 = por %p77, %p78
      %p80 = scmp.ne.s32.totalorder %s72, %s75
      %p81 = scmp.eq.s32.totalorder %s15, 0
      %p82 = por %p80, %p81
      %p83 = scmp.ne.s32.totalorder %s72, %s75
      %p84 = scmp.eq.s32.totalorder %s20, 1
      %p85 = por %p83, %p84
      %p86 = scmp.ne.s32.totalorder %s75, %s76
      %p87 = scmp.eq.s32.totalorder %s20, 0
      %p88 = por %p86, %p87
      %p89 = scmp.ne.s32.totalorder %s75, %s76
      %p90 = scmp.eq.s32.totalorder %s21, 1
      %p91 = por %p89, %p90
      %p93 = scmp.ne.s32.totalorder %s76, %s92
      %p94 = scmp.eq.s32.totalorder %s21, 0
      %p95 = por %p93, %p94
      %p96 = scmp.le.s32.totalorder 1, %s15
      %p97 = scmp.lt.s32.totalorder %s15, 3
      %p98 = pnand %p96, %p97
      %p99 = pneg %p98
      // Predicated region
      $region9: #{tpu_custom_call.1} parent=5 // pred_check
        _
      $region10: #{tpu_custom_call.1} parent=5 // pred_check_branch
        %101 = sbr.rel (%p98) target = $region12
      $region11: #{tpu_custom_call.1} parent=5 // pred_region
        %s102 = ssub.s32 %s15, 1
        // Predicated region
        $region13: #{tpu_custom_call.1} parent=11 // pred_check
          %p103 = pneg %p36
        $region14: #{tpu_custom_call.1} parent=11 // pred_check_branch
          %105 = sbr.rel (%p103) target = $region16
        $region15: #{tpu_custom_call.1} parent=11 // pred_region
          %s107 = ssub.s32 256, 256
          %108 = vsyncadd [#allocation3], %s107
          %s109 = sshll.u32 [#allocation2], 4
          %s110 = int_to_ptr.vmem [resolvable:$true] %s109
          %115 = dma.hbm_to_vmem [thread:$0]  %s0, 256, %s110, [#allocation3], 128, 128, 8
        $region16: #{tpu_custom_call.1} parent=11 // pred_fallthru
          _
      $region12: #{tpu_custom_call.1} parent=5 // pred_fallthru
        _
      %p116 = scmp.lt.s32.totalorder %s15, 2
      // Predicated region
      $region17: #{tpu_custom_call.1} parent=5 // pred_check
        %p117 = pneg %p116
      $region18: #{tpu_custom_call.1} parent=5 // pred_check_branch
        %119 = sbr.rel (%p117) target = $region20
      $region19: #{tpu_custom_call.1} parent=5 // pred_region
        // Predicated region
        $region21: #{tpu_custom_call.1} parent=19 // pred_check
          %p120 = pneg %p56
        $region22: #{tpu_custom_call.1} parent=19 // pred_check_branch
          %122 = sbr.rel (%p120) target = $region24
        $region23: #{tpu_custom_call.1} parent=19 // pred_region
          %s123 = sand.u32 %s46, 1
          %s124 = scalar_lea.sflag [#allocation6], %s123
          %s125 = sand.u32 %s46, 1
          %s126 = smul.addr %s125, 8
          %s127 = scalar_lea.vmem [#allocation5], %s126
          %s128 = smul.u32 4, %s15
          %s130 = ssub.s32 128, 128
          %131 = vsyncadd %s124, %s130
          %s132 = smul.addr %s128, 32
          %s133 = scalar_lea.hbm %s1, %s132
          %s135 = sshll.u32 %s127, 4
          %s136 = int_to_ptr.vmem [resolvable:$true] %s135
          %138 = dma.hbm_to_vmem [thread:$0]  %s133, 128, %s136, %s124
        $region24: #{tpu_custom_call.1} parent=19 // pred_fallthru
          _
      $region20: #{tpu_custom_call.1} parent=5 // pred_fallthru
        _
      %p139 = scmp.le.s32.totalorder 1, %s15
      %p140 = scmp.lt.s32.totalorder %s15, 3
      %p141 = pnand %p139, %p140
      %p142 = pneg %p141
      // Predicated region
      $region25: #{tpu_custom_call.1} parent=5 // pred_check
        _
      $region26: #{tpu_custom_call.1} parent=5 // pred_check_branch
        %144 = sbr.rel (%p141) target = $region28
      $region27: #{tpu_custom_call.1} parent=5 // pred_region
        %s145 = ssub.s32 %s15, 1
        // Predicated region
        $region29: #{tpu_custom_call.1} parent=27 // pred_check
          %p146 = pneg %p36
        $region30: #{tpu_custom_call.1} parent=27 // pred_check_branch
          %148 = sbr.rel (%p146) target = $region32
        $region31: #{tpu_custom_call.1} parent=27 // pred_region
          %149 = dma.done [#allocation3], 256
        $region32: #{tpu_custom_call.1} parent=27 // pred_fallthru
          _
        %s150 = sand.u32 %s49, 1
        %s151 = scalar_lea.sflag [#allocation6], %s150
        %s152 = sand.u32 %s49, 1
        %s153 = smul.addr %s152, 8
        %s154 = scalar_lea.vmem [#allocation5], %s153
        // Predicated region
        $region33: #{tpu_custom_call.1} parent=27 // pred_check
          %p155 = pneg %p62
        $region34: #{tpu_custom_call.1} parent=27 // pred_check_branch
          %157 = sbr.rel (%p155) target = $region36
        $region35: #{tpu_custom_call.1} parent=27 // pred_region
          %158 = dma.done %s151, 128
        $region36: #{tpu_custom_call.1} parent=27 // pred_fallthru
          _
        %p159 = pneg %p36
        %p160 = pneg %p33
        %s161 = sand.u32 %s49, 1
        %s162 = scalar_lea.sflag [#allocation6], %s161
        %s163 = sand.u32 %s49, 1
        %s164 = smul.addr %s163, 8
        %s165 = scalar_lea.vmem [#allocation5], %s164
        %p166 = pneg %p62
        %p167 = pneg %p59
        %p168 = pneg %p88
        %p169 = pneg %p85
        %s170 = sand.u32 %s75, 1
        %s171 = scalar_lea.sflag [#allocation4], %s170
        %s172 = sand.u32 %s75, 1
        %s173 = smul.addr %s172, 4
        %s174 = scalar_lea.vmem [#allocation7], %s173
        %s175 = smul.u32 4, %s20
        %s176 = smul.u32 4, %s20
        %v177 = vld [vmem:[#allocation2] sm:$0xff]
        %v178 = vld [vmem:[#allocation2 + $0x8] sm:$0x3]
        %v179 = vld [vmem:[%s154] sm:$0xff]
        %181 = vset.pattern.permute.xlu0 0
        %182 = vperm.xlu0 %181, %v177
        %v183 = vpop.permute.xlu0 %182
        %186 = vset.pattern.permute.xlu0 0
        %187 = vperm.xlu0 %186, %v178
        %v188 = vpop.permute.xlu0 %187
        %v191 = vlaneseq
        %v192 = vshrl.u32 %v191, 7
        %v193 = vsub.s32 0, %v192
        %v194 = vrot.slane %v179, %v193
        %v195 = vlaneseq
        %v196 = vshrl.u32 %v195, 7
        %v197 = vsub.s32 2, %v196
        %v198 = vrot.slane %v179, %v197
        %v199 = vlaneseq
        %v200 = vshrl.u32 %v199, 7
        %v201 = vsub.s32 4, %v200
        %v202 = vrot.slane %v179, %v201
        %v203 = vlaneseq
        %v204 = vshrl.u32 %v203, 7
        %v205 = vsub.s32 6, %v204
        %v206 = vrot.slane %v179, %v205
        %v211 = vlaneseq
        %v212 = vshrl.u32 %v211, 7
        %v213 = vsub.s32 0, %v212
        %v214 = vrot.slane %v194, %v213
        %v215 = vlaneseq
        %v216 = vshrl.u32 %v215, 7
        %v217 = vsub.s32 0, %v216
        %v218 = vrot.slane %v198, %v217
        %v219 = vlaneseq
        %v220 = vshrl.u32 %v219, 7
        %v221 = vsub.s32 0, %v220
        %v222 = vrot.slane %v202, %v221
        %v223 = vlaneseq
        %v224 = vshrl.u32 %v223, 7
        %v225 = vsub.s32 0, %v224
        %v226 = vrot.slane %v206, %v225
        %v227 = vmul.f32 %v183, %v214
        %v228 = vmul.f32 %v183, %v218
        %v229 = vmul.f32 %v183, %v222
        %v230 = vmul.f32 %v183, %v226
        %v231 = vmul.f32 %v188, %v214
        %v232 = vmul.f32 %v188, %v218
        %v233 = vmul.f32 %v188, %v222
        %v234 = vmul.f32 %v188, %v226
        %235 = vset.pattern.permute.xlu0 2
        %236 = vperm.xlu0 %235, %v177
        %v237 = vpop.permute.xlu0 %236
        %239 = vset.pattern.permute.xlu0 2
        %240 = vperm.xlu0 %239, %v178
        %v241 = vpop.permute.xlu0 %240
        %v243 = vadd.f32 %v237, %v227
        %v244 = vadd.f32 %v237, %v228
        %v245 = vadd.f32 %v237, %v229
        %v246 = vadd.f32 %v237, %v230
        %v247 = vadd.f32 %v241, %v231
        %v248 = vadd.f32 %v241, %v232
        %v249 = vadd.f32 %v241, %v233
        %v250 = vadd.f32 %v241, %v234
        %251 = vset.pattern.permute.xlu0 1
        %252 = vperm.xlu0 %251, %v177
        %v253 = vpop.permute.xlu0 %252
        %255 = vset.pattern.permute.xlu0 1
        %256 = vperm.xlu0 %255, %v178
        %v257 = vpop.permute.xlu0 %256
        %v259 = vlaneseq
        %v260 = vshrl.u32 %v259, 7
        %v261 = vsub.s32 1, %v260
        %v262 = vrot.slane %v179, %v261
        %v263 = vlaneseq
        %v264 = vshrl.u32 %v263, 7
        %v265 = vsub.s32 3, %v264
        %v266 = vrot.slane %v179, %v265
        %v267 = vlaneseq
        %v268 = vshrl.u32 %v267, 7
        %v269 = vsub.s32 5, %v268
        %v270 = vrot.slane %v179, %v269
        %v271 = vlaneseq
        %v272 = vshrl.u32 %v271, 7
        %v273 = vsub.s32 7, %v272
        %v274 = vrot.slane %v179, %v273
        %v279 = vlaneseq
        %v280 = vshrl.u32 %v279, 7
        %v281 = vsub.s32 1, %v280
        %v282 = vrot.slane %v262, %v281
        %v283 = vlaneseq
        %v284 = vshrl.u32 %v283, 7
        %v285 = vsub.s32 1, %v284
        %v286 = vrot.slane %v266, %v285
        %v287 = vlaneseq
        %v288 = vshrl.u32 %v287, 7
        %v289 = vsub.s32 1, %v288
        %v290 = vrot.slane %v270, %v289
        %v291 = vlaneseq
        %v292 = vshrl.u32 %v291, 7
        %v293 = vsub.s32 1, %v292
        %v294 = vrot.slane %v274, %v293
        %v295 = vmul.f32 %v253, %v282
        %v296 = vmul.f32 %v253, %v286
        %v297 = vmul.f32 %v253, %v290
        %v298 = vmul.f32 %v253, %v294
        %v299 = vmul.f32 %v257, %v282
        %v300 = vmul.f32 %v257, %v286
        %v301 = vmul.f32 %v257, %v290
        %v302 = vmul.f32 %v257, %v294
        %v303 = vadd.f32 %v243, %v295
        %v304 = vadd.f32 %v244, %v296
        %v305 = vadd.f32 %v245, %v297
        %v306 = vadd.f32 %v246, %v298
        %v307 = vadd.f32 %v247, %v299
        %v308 = vadd.f32 %v248, %v300
        %v309 = vadd.f32 %v249, %v301
        %v310 = vadd.f32 %v250, %v302
        %v311 = vmax.f32 %v303, 0.0
        %v312 = vmax.f32 %v304, 0.0
        %v313 = vmax.f32 %v305, 0.0
        %v314 = vmax.f32 %v306, 0.0
        %v315 = vmax.f32 %v307, 0.0
        %v316 = vmax.f32 %v308, 0.0
        %v317 = vmax.f32 %v309, 0.0
        %v318 = vmax.f32 %v310, 0.0
        %319 = vset.pattern.permute.xlu0 3
        %320 = vperm.xlu0 %319, %v177
        %v321 = vpop.permute.xlu0 %320
        %323 = vset.pattern.permute.xlu0 3
        %324 = vperm.xlu0 %323, %v178
        %v325 = vpop.permute.xlu0 %324
        %v327 = vlaneseq
        %v328 = vshrl.u32 %v327, 7
        %v329 = vsub.s32 0, %v328
        %v330 = vrot.slane %v311, %v329
        %v331 = vlaneseq
        %v332 = vshrl.u32 %v331, 7
        %v333 = vsub.s32 0, %v332
        %v334 = vrot.slane %v312, %v333
        %v335 = vlaneseq
        %v336 = vshrl.u32 %v335, 7
        %v337 = vsub.s32 0, %v336
        %v338 = vrot.slane %v313, %v337
        %v339 = vlaneseq
        %v340 = vshrl.u32 %v339, 7
        %v341 = vsub.s32 0, %v340
        %v342 = vrot.slane %v314, %v341
        %v343 = vmul.f32 %v321, %v330
        %v344 = vmul.f32 %v321, %v334
        %v345 = vmul.f32 %v321, %v338
        %v346 = vmul.f32 %v321, %v342
        %v347 = vmul.f32 %v325, %v330
        %v348 = vmul.f32 %v325, %v334
        %v349 = vmul.f32 %v325, %v338
        %v350 = vmul.f32 %v325, %v342
        %351 = vset.pattern.permute.xlu0 13
        %352 = vperm.xlu0 %351, %v177
        %v353 = vpop.permute.xlu0 %352
        %355 = vset.pattern.permute.xlu0 13
        %356 = vperm.xlu0 %355, %v178
        %v357 = vpop.permute.xlu0 %356
        %v359 = vadd.f32 %v353, %v343
        %v360 = vadd.f32 %v353, %v344
        %v361 = vadd.f32 %v353, %v345
        %v362 = vadd.f32 %v353, %v346
        %v363 = vadd.f32 %v357, %v347
        %v364 = vadd.f32 %v357, %v348
        %v365 = vadd.f32 %v357, %v349
        %v366 = vadd.f32 %v357, %v350
        %367 = vset.pattern.permute.xlu0 4
        %368 = vperm.xlu0 %367, %v177
        %v369 = vpop.permute.xlu0 %368
        %371 = vset.pattern.permute.xlu0 4
        %372 = vperm.xlu0 %371, %v178
        %v373 = vpop.permute.xlu0 %372
        %v375 = vlaneseq
        %v376 = vshrl.u32 %v375, 7
        %v377 = vsub.s32 1, %v376
        %v378 = vrot.slane %v311, %v377
        %v379 = vlaneseq
        %v380 = vshrl.u32 %v379, 7
        %v381 = vsub.s32 1, %v380
        %v382 = vrot.slane %v312, %v381
        %v383 = vlaneseq
        %v384 = vshrl.u32 %v383, 7
        %v385 = vsub.s32 1, %v384
        %v386 = vrot.slane %v313, %v385
        %v387 = vlaneseq
        %v388 = vshrl.u32 %v387, 7
        %v389 = vsub.s32 1, %v388
        %v390 = vrot.slane %v314, %v389
        %v391 = vmul.f32 %v369, %v378
        %v392 = vmul.f32 %v369, %v382
        %v393 = vmul.f32 %v369, %v386
        %v394 = vmul.f32 %v369, %v390
        %v395 = vmul.f32 %v373, %v378
        %v396 = vmul.f32 %v373, %v382
        %v397 = vmul.f32 %v373, %v386
        %v398 = vmul.f32 %v373, %v390
        %v399 = vadd.f32 %v359, %v391
        %v400 = vadd.f32 %v360, %v392
        %v401 = vadd.f32 %v361, %v393
        %v402 = vadd.f32 %v362, %v394
        %v403 = vadd.f32 %v363, %v395
        %v404 = vadd.f32 %v364, %v396
        %v405 = vadd.f32 %v365, %v397
        %v406 = vadd.f32 %v366, %v398
        %407 = vset.pattern.permute.xlu0 5
        %408 = vperm.xlu0 %407, %v177
        %v409 = vpop.permute.xlu0 %408
        %411 = vset.pattern.permute.xlu0 5
        %412 = vperm.xlu0 %411, %v178
        %v413 = vpop.permute.xlu0 %412
        %v415 = vlaneseq
        %v416 = vshrl.u32 %v415, 7
        %v417 = vsub.s32 2, %v416
        %v418 = vrot.slane %v311, %v417
        %v419 = vlaneseq
        %v420 = vshrl.u32 %v419, 7
        %v421 = vsub.s32 2, %v420
        %v422 = vrot.slane %v312, %v421
        %v423 = vlaneseq
        %v424 = vshrl.u32 %v423, 7
        %v425 = vsub.s32 2, %v424
        %v426 = vrot.slane %v313, %v425
        %v427 = vlaneseq
        %v428 = vshrl.u32 %v427, 7
        %v429 = vsub.s32 2, %v428
        %v430 = vrot.slane %v314, %v429
        %v431 = vmul.f32 %v409, %v418
        %v432 = vmul.f32 %v409, %v422
        %v433 = vmul.f32 %v409, %v426
        %v434 = vmul.f32 %v409, %v430
        %v435 = vmul.f32 %v413, %v418
        %v436 = vmul.f32 %v413, %v422
        %v437 = vmul.f32 %v413, %v426
        %v438 = vmul.f32 %v413, %v430
        %v439 = vadd.f32 %v399, %v431
        %v440 = vadd.f32 %v400, %v432
        %v441 = vadd.f32 %v401, %v433
        %v442 = vadd.f32 %v402, %v434
        %v443 = vadd.f32 %v403, %v435
        %v444 = vadd.f32 %v404, %v436
        %v445 = vadd.f32 %v405, %v437
        %v446 = vadd.f32 %v406, %v438
        %447 = vset.pattern.permute.xlu0 6
        %448 = vperm.xlu0 %447, %v177
        %v449 = vpop.permute.xlu0 %448
        %451 = vset.pattern.permute.xlu0 6
        %452 = vperm.xlu0 %451, %v178
        %v453 = vpop.permute.xlu0 %452
        %v455 = vlaneseq
        %v456 = vshrl.u32 %v455, 7
        %v457 = vsub.s32 3, %v456
        %v458 = vrot.slane %v311, %v457
        %v459 = vlaneseq
        %v460 = vshrl.u32 %v459, 7
        %v461 = vsub.s32 3, %v460
        %v462 = vrot.slane %v312, %v461
        %v463 = vlaneseq
        %v464 = vshrl.u32 %v463, 7
        %v465 = vsub.s32 3, %v464
        %v466 = vrot.slane %v313, %v465
        %v467 = vlaneseq
        %v468 = vshrl.u32 %v467, 7
        %v469 = vsub.s32 3, %v468
        %v470 = vrot.slane %v314, %v469
        %v471 = vmul.f32 %v449, %v458
        %v472 = vmul.f32 %v449, %v462
        %v473 = vmul.f32 %v449, %v466
        %v474 = vmul.f32 %v449, %v470
        %v475 = vmul.f32 %v453, %v458
        %v476 = vmul.f32 %v453, %v462
        %v477 = vmul.f32 %v453, %v466
        %v478 = vmul.f32 %v453, %v470
        %v479 = vadd.f32 %v439, %v471
        %v480 = vadd.f32 %v440, %v472
        %v481 = vadd.f32 %v441, %v473
        %v482 = vadd.f32 %v442, %v474
        %v483 = vadd.f32 %v443, %v475
        %v484 = vadd.f32 %v444, %v476
        %v485 = vadd.f32 %v445, %v477
        %v486 = vadd.f32 %v446, %v478
        %487 = vset.pattern.permute.xlu0 7
        %488 = vperm.xlu0 %487, %v177
        %v489 = vpop.permute.xlu0 %488
        %491 = vset.pattern.permute.xlu0 7
        %492 = vperm.xlu0 %491, %v178
        %v493 = vpop.permute.xlu0 %492
        %v495 = vlaneseq
        %v496 = vshrl.u32 %v495, 7
        %v497 = vsub.s32 4, %v496
        %v498 = vrot.slane %v311, %v497
        %v499 = vlaneseq
        %v500 = vshrl.u32 %v499, 7
        %v501 = vsub.s32 4, %v500
        %v502 = vrot.slane %v312, %v501
        %v503 = vlaneseq
        %v504 = vshrl.u32 %v503, 7
        %v505 = vsub.s32 4, %v504
        %v506 = vrot.slane %v313, %v505
        %v507 = vlaneseq
        %v508 = vshrl.u32 %v507, 7
        %v509 = vsub.s32 4, %v508
        %v510 = vrot.slane %v314, %v509
        %v511 = vmul.f32 %v489, %v498
        %v512 = vmul.f32 %v489, %v502
        %v513 = vmul.f32 %v489, %v506
        %v514 = vmul.f32 %v489, %v510
        %v515 = vmul.f32 %v493, %v498
        %v516 = vmul.f32 %v493, %v502
        %v517 = vmul.f32 %v493, %v506
        %v518 = vmul.f32 %v493, %v510
        %v519 = vadd.f32 %v479, %v511
        %v520 = vadd.f32 %v480, %v512
        %v521 = vadd.f32 %v481, %v513
        %v522 = vadd.f32 %v482, %v514
        %v523 = vadd.f32 %v483, %v515
        %v524 = vadd.f32 %v484, %v516
        %v525 = vadd.f32 %v485, %v517
        %v526 = vadd.f32 %v486, %v518
        %527 = vset.pattern.permute.xlu0 8
        %528 = vperm.xlu0 %527, %v177
        %v529 = vpop.permute.xlu0 %528
        %531 = vset.pattern.permute.xlu0 8
        %532 = vperm.xlu0 %531, %v178
        %v533 = vpop.permute.xlu0 %532
        %v535 = vlaneseq
        %v536 = vshrl.u32 %v535, 7
        %v537 = vsub.s32 5, %v536
        %v538 = vrot.slane %v311, %v537
        %v539 = vlaneseq
        %v540 = vshrl.u32 %v539, 7
        %v541 = vsub.s32 5, %v540
        %v542 = vrot.slane %v312, %v541
        %v543 = vlaneseq
        %v544 = vshrl.u32 %v543, 7
        %v545 = vsub.s32 5, %v544
        %v546 = vrot.slane %v313, %v545
        %v547 = vlaneseq
        %v548 = vshrl.u32 %v547, 7
        %v549 = vsub.s32 5, %v548
        %v550 = vrot.slane %v314, %v549
        %v551 = vmul.f32 %v529, %v538
        %v552 = vmul.f32 %v529, %v542
        %v553 = vmul.f32 %v529, %v546
        %v554 = vmul.f32 %v529, %v550
        %v555 = vmul.f32 %v533, %v538
        %v556 = vmul.f32 %v533, %v542
        %v557 = vmul.f32 %v533, %v546
        %v558 = vmul.f32 %v533, %v550
        %v559 = vadd.f32 %v519, %v551
        %v560 = vadd.f32 %v520, %v552
        %v561 = vadd.f32 %v521, %v553
        %v562 = vadd.f32 %v522, %v554
        %v563 = vadd.f32 %v523, %v555
        %v564 = vadd.f32 %v524, %v556
        %v565 = vadd.f32 %v525, %v557
        %v566 = vadd.f32 %v526, %v558
        %567 = vset.pattern.permute.xlu0 9
        %568 = vperm.xlu0 %567, %v177
        %v569 = vpop.permute.xlu0 %568
        %571 = vset.pattern.permute.xlu0 9
        %572 = vperm.xlu0 %571, %v178
        %v573 = vpop.permute.xlu0 %572
        %v575 = vlaneseq
        %v576 = vshrl.u32 %v575, 7
        %v577 = vsub.s32 6, %v576
        %v578 = vrot.slane %v311, %v577
        %v579 = vlaneseq
        %v580 = vshrl.u32 %v579, 7
        %v581 = vsub.s32 6, %v580
        %v582 = vrot.slane %v312, %v581
        %v583 = vlaneseq
        %v584 = vshrl.u32 %v583, 7
        %v585 = vsub.s32 6, %v584
        %v586 = vrot.slane %v313, %v585
        %v587 = vlaneseq
        %v588 = vshrl.u32 %v587, 7
        %v589 = vsub.s32 6, %v588
        %v590 = vrot.slane %v314, %v589
        %v591 = vmul.f32 %v569, %v578
        %v592 = vmul.f32 %v569, %v582
        %v593 = vmul.f32 %v569, %v586
        %v594 = vmul.f32 %v569, %v590
        %v595 = vmul.f32 %v573, %v578
        %v596 = vmul.f32 %v573, %v582
        %v597 = vmul.f32 %v573, %v586
        %v598 = vmul.f32 %v573, %v590
        %v599 = vadd.f32 %v559, %v591
        %v600 = vadd.f32 %v560, %v592
        %v601 = vadd.f32 %v561, %v593
        %v602 = vadd.f32 %v562, %v594
        %v603 = vadd.f32 %v563, %v595
        %v604 = vadd.f32 %v564, %v596
        %v605 = vadd.f32 %v565, %v597
        %v606 = vadd.f32 %v566, %v598
        %607 = vset.pattern.permute.xlu0 10
        %608 = vperm.xlu0 %607, %v177
        %v609 = vpop.permute.xlu0 %608
        %611 = vset.pattern.permute.xlu0 10
        %612 = vperm.xlu0 %611, %v178
        %v613 = vpop.permute.xlu0 %612
        %v615 = vlaneseq
        %v616 = vshrl.u32 %v615, 7
        %v617 = vsub.s32 7, %v616
        %v618 = vrot.slane %v311, %v617
        %v619 = vlaneseq
        %v620 = vshrl.u32 %v619, 7
        %v621 = vsub.s32 7, %v620
        %v622 = vrot.slane %v312, %v621
        %v623 = vlaneseq
        %v624 = vshrl.u32 %v623, 7
        %v625 = vsub.s32 7, %v624
        %v626 = vrot.slane %v313, %v625
        %v627 = vlaneseq
        %v628 = vshrl.u32 %v627, 7
        %v629 = vsub.s32 7, %v628
        %v630 = vrot.slane %v314, %v629
        %v631 = vmul.f32 %v609, %v618
        %v632 = vmul.f32 %v609, %v622
        %v633 = vmul.f32 %v609, %v626
        %v634 = vmul.f32 %v609, %v630
        %v635 = vmul.f32 %v613, %v618
        %v636 = vmul.f32 %v613, %v622
        %v637 = vmul.f32 %v613, %v626
        %v638 = vmul.f32 %v613, %v630
        %v639 = vadd.f32 %v599, %v631
        %v640 = vadd.f32 %v600, %v632
        %v641 = vadd.f32 %v601, %v633
        %v642 = vadd.f32 %v602, %v634
        %v643 = vadd.f32 %v603, %v635
        %v644 = vadd.f32 %v604, %v636
        %v645 = vadd.f32 %v605, %v637
        %v646 = vadd.f32 %v606, %v638
        %647 = vset.pattern.permute.xlu0 11
        %648 = vperm.xlu0 %647, %v177
        %v649 = vpop.permute.xlu0 %648
        %651 = vset.pattern.permute.xlu0 11
        %652 = vperm.xlu0 %651, %v178
        %v653 = vpop.permute.xlu0 %652
        %v655 = vlaneseq
        %v656 = vshrl.u32 %v655, 7
        %v657 = vsub.s32 0, %v656
        %v658 = vrot.slane %v315, %v657
        %v659 = vlaneseq
        %v660 = vshrl.u32 %v659, 7
        %v661 = vsub.s32 0, %v660
        %v662 = vrot.slane %v316, %v661
        %v663 = vlaneseq
        %v664 = vshrl.u32 %v663, 7
        %v665 = vsub.s32 0, %v664
        %v666 = vrot.slane %v317, %v665
        %v667 = vlaneseq
        %v668 = vshrl.u32 %v667, 7
        %v669 = vsub.s32 0, %v668
        %v670 = vrot.slane %v318, %v669
        %v671 = vmul.f32 %v649, %v658
        %v672 = vmul.f32 %v649, %v662
        %v673 = vmul.f32 %v649, %v666
        %v674 = vmul.f32 %v649, %v670
        %v675 = vmul.f32 %v653, %v658
        %v676 = vmul.f32 %v653, %v662
        %v677 = vmul.f32 %v653, %v666
        %v678 = vmul.f32 %v653, %v670
        %v679 = vadd.f32 %v639, %v671
        %v680 = vadd.f32 %v640, %v672
        %v681 = vadd.f32 %v641, %v673
        %v682 = vadd.f32 %v642, %v674
        %v683 = vadd.f32 %v643, %v675
        %v684 = vadd.f32 %v644, %v676
        %v685 = vadd.f32 %v645, %v677
        %v686 = vadd.f32 %v646, %v678
        %687 = vset.pattern.permute.xlu0 12
        %688 = vperm.xlu0 %687, %v177
        %v689 = vpop.permute.xlu0 %688
        %691 = vset.pattern.permute.xlu0 12
        %692 = vperm.xlu0 %691, %v178
        %v693 = vpop.permute.xlu0 %692
        %v695 = vlaneseq
        %v696 = vshrl.u32 %v695, 7
        %v697 = vsub.s32 1, %v696
        %v698 = vrot.slane %v315, %v697
        %v699 = vlaneseq
        %v700 = vshrl.u32 %v699, 7
        %v701 = vsub.s32 1, %v700
        %v702 = vrot.slane %v316, %v701
        %v703 = vlaneseq
        %v704 = vshrl.u32 %v703, 7
        %v705 = vsub.s32 1, %v704
        %v706 = vrot.slane %v317, %v705
        %v707 = vlaneseq
        %v708 = vshrl.u32 %v707, 7
        %v709 = vsub.s32 1, %v708
        %v710 = vrot.slane %v318, %v709
        %v711 = vmul.f32 %v689, %v698
        %v712 = vmul.f32 %v689, %v702
        %v713 = vmul.f32 %v689, %v706
        %v714 = vmul.f32 %v689, %v710
        %v715 = vmul.f32 %v693, %v698
        %v716 = vmul.f32 %v693, %v702
        %v717 = vmul.f32 %v693, %v706
        %v718 = vmul.f32 %v693, %v710
        %v719 = vadd.f32 %v679, %v711
        %v720 = vadd.f32 %v680, %v712
        %v721 = vadd.f32 %v681, %v713
        %v722 = vadd.f32 %v682, %v714
        %v723 = vadd.f32 %v683, %v715
        %v724 = vadd.f32 %v684, %v716
        %v725 = vadd.f32 %v685, %v717
        %v726 = vadd.f32 %v686, %v718
        %v727 = vmax.f32 %v719, 0.0
        %v728 = vmax.f32 %v720, 0.0
        %v729 = vmax.f32 %v721, 0.0
        %v730 = vmax.f32 %v722, 0.0
        %v731 = vmax.f32 %v723, 0.0
        %v732 = vmax.f32 %v724, 0.0
        %v733 = vmax.f32 %v725, 0.0
        %v734 = vmax.f32 %v726, 0.0
        %735 = vset.pattern.permute.xlu0 14
        %736 = vperm.xlu0 %735, %v177
        %v737 = vpop.permute.xlu0 %736
        %739 = vset.pattern.permute.xlu0 14
        %740 = vperm.xlu0 %739, %v178
        %v741 = vpop.permute.xlu0 %740
        %v743 = vmul.f32 %v737, %v727
        %v744 = vmul.f32 %v737, %v728
        %v745 = vmul.f32 %v737, %v729
        %v746 = vmul.f32 %v737, %v730
        %v747 = vmul.f32 %v741, %v731
        %v748 = vmul.f32 %v741, %v732
        %v749 = vmul.f32 %v741, %v733
        %v750 = vmul.f32 %v741, %v734
        %vm751 = vcmask 1041408
        %v752 = vsel %vm751, %v747, 0.0
        %v753 = vadd.f32 %v743, %v752
        %v754 = vrot.slane %v753, 4
        %v755 = vadd.f32 %v753, %v754
        %v756 = vrot.slane %v755, 2
        %v757 = vadd.f32 %v755, %v756
        %v758 = vrot.slane %v757, 1
        %v759 = vadd.f32 %v757, %v758
        %v760 = vsel %vm751, %v748, 0.0
        %v761 = vadd.f32 %v744, %v760
        %v762 = vrot.slane %v761, 4
        %v763 = vadd.f32 %v761, %v762
        %v764 = vrot.slane %v763, 2
        %v765 = vadd.f32 %v763, %v764
        %v766 = vrot.slane %v765, 1
        %v767 = vadd.f32 %v765, %v766
        %v768 = vsel %vm751, %v749, 0.0
        %v769 = vadd.f32 %v745, %v768
        %v770 = vrot.slane %v769, 4
        %v771 = vadd.f32 %v769, %v770
        %v772 = vrot.slane %v771, 2
        %v773 = vadd.f32 %v771, %v772
        %v774 = vrot.slane %v773, 1
        %v775 = vadd.f32 %v773, %v774
        %v776 = vsel %vm751, %v750, 0.0
        %v777 = vadd.f32 %v746, %v776
        %v778 = vrot.slane %v777, 4
        %v779 = vadd.f32 %v777, %v778
        %v780 = vrot.slane %v779, 2
        %v781 = vadd.f32 %v779, %v780
        %v782 = vrot.slane %v781, 1
        %v783 = vadd.f32 %v781, %v782
        %784 = vset.pattern.permute.xlu0 15
        %785 = vperm.xlu0 %784, %v177
        %v786 = vpop.permute.xlu0 %785
        %v788 = vadd.f32 %v786, %v759
        %v789 = vadd.f32 %v786, %v767
        %v790 = vadd.f32 %v786, %v775
        %v791 = vadd.f32 %v786, %v783
        %v796 = vcombine.low %v788, %v789
        %v797 = vcombine.low %v790, %v791
        %v799 = vunpack.c.l.s4 1966171168
        %v800 = vunpack.c.0.s8 %v799
        %v801 = vlaneseq
        %v802 = vshrl.u32 %v801, 7
        %v803 = vsub.s32 %v800, %v802
        %v804 = vrot.slane %v796, %v803
        %v806 = vunpack.c.l.s4 1966171168
        %v807 = vunpack.c.0.s8 %v806
        %v808 = vlaneseq
        %v809 = vshrl.u32 %v808, 7
        %v810 = vsub.s32 %v807, %v809
        %v811 = vrot.slane %v797, %v810
        %v812 = vcombine.low %v804, %v811
        %v814 = vunpack.c.l.s4 1966171168
        %v815 = vunpack.c.0.s8 %v814
        %v816 = vlaneseq
        %v817 = vshrl.u32 %v816, 7
        %v818 = vsub.s32 %v815, %v817
        %v819 = vrot.slane %v812, %v818
        %v821 = vlaneseq
        %vm822 = vcmp.ge.s32.totalorder %v821, 0
        %vm823 = vcmp.lt.s32.totalorder %v821, 512
        %vm824 = vmand %vm822, %vm823
        %825 = vst.msk [vmem:[%s174] sm:$0xf] %vm824, %v819
        %s826 = sand.u32 %s75, 1
        %s827 = scalar_lea.sflag [#allocation4], %s826
        %s828 = sand.u32 %s75, 1
        %s829 = smul.addr %s828, 4
        %s830 = scalar_lea.vmem [#allocation7], %s829
        // Predicated region
        $region37: #{tpu_custom_call.1} parent=27 // pred_check
          %p831 = pneg %p85
        $region38: #{tpu_custom_call.1} parent=27 // pred_check_branch
          %833 = sbr.rel (%p831) target = $region40
        $region39: #{tpu_custom_call.1} parent=27 // pred_region
          %s834 = smul.u32 4, %s20
          %s836 = ssub.s32 64, 64
          %837 = vsyncadd %s827, %s836
          %s838 = smul.addr %s834, 16
          %s839 = scalar_lea.hbm %s2, %s838
          %s841 = sshll.u32 %s830, 4
          %s842 = int_to_ptr.vmem [resolvable:$true] %s841
          %844 = dma.vmem_to_hbm [thread:$0]  %s842, 64, %s839, %s827
        $region40: #{tpu_custom_call.1} parent=27 // pred_fallthru
          _
      $region28: #{tpu_custom_call.1} parent=5 // pred_fallthru
        _
      %p845 = scmp.le.s32.totalorder 2, %s15
      // Predicated region
      $region41: #{tpu_custom_call.1} parent=5 // pred_check
        %p846 = pneg %p845
      $region42: #{tpu_custom_call.1} parent=5 // pred_check_branch
        %848 = sbr.rel (%p846) target = $region44
      $region43: #{tpu_custom_call.1} parent=5 // pred_region
        %s849 = ssub.s32 %s15, 2
        // Predicated region
        $region45: #{tpu_custom_call.1} parent=43 // pred_check
          %p850 = pneg %p91
        $region46: #{tpu_custom_call.1} parent=43 // pred_check_branch
          %852 = sbr.rel (%p850) target = $region48
        $region47: #{tpu_custom_call.1} parent=43 // pred_region
          %s853 = sand.u32 %s76, 1
          %s854 = scalar_lea.sflag [#allocation4], %s853
          %s855 = sand.u32 %s76, 1
          %s856 = smul.addr %s855, 4
          %s857 = scalar_lea.vmem [#allocation7], %s856
          %858 = dma.done %s854, 64
        $region48: #{tpu_custom_call.1} parent=43 // pred_fallthru
          _
      $region44: #{tpu_custom_call.1} parent=5 // pred_fallthru
        _
    $region6: #{tpu_custom_call.1} parent=1 // loop_footer
      %s19 = sadd.s32 1, %s15
    $region7: #{tpu_custom_call.1} parent=1 // loop_footer_branch
      %14 = sbr.rel target = $region3
    $region8: #{tpu_custom_call.1} parent=1 // loop_exit
      _
    %859 = vsyncpa [#allocation3], 1
    %s860 = scalar_lea.sflag [#allocation3], 1
    %861 = vsyncpa %s860, 1
    %862 = vsyncpa [#allocation6], 1
    %s863 = scalar_lea.sflag [#allocation6], 1
    %864 = vsyncpa %s863, 1
    %865 = vsyncpa [#allocation4], 1
    %s866 = scalar_lea.sflag [#allocation4], 1
    %867 = vsyncpa %s866, 1

</llo_original>
